<compile_context>
chip_gen: v6e
topology: v6e:2x2x1
jax: 0.10.0
libtpu: 0.0.40
codegen_flags: <defaults>
</compile_context>

<pallas_src>
import numpy as np

import jax
import jax.numpy as jnp
from jax.experimental import pallas as pl
from jax.experimental.pallas import tpu as pltpu


# Edge tap of the separable, center-normalized Gaussian (sigma = 0.5):
# scipy.ndimage.gaussian_filter(delta_3x3, 0.5) / center == outer(v, v) with
# v = [r, 1, r], r = exp(-1/(2*sigma^2)) + exp(-4/(2*sigma^2)) = e^-2 + e^-8.
_EDGE_TAP = float(np.exp(-2.0) + np.exp(-8.0))


def gaussian3x3_kernel() -> jnp.ndarray:
    """Full 3x3 weight (only used by the reference check in __main__)."""
    v = np.array([_EDGE_TAP, 1.0, _EDGE_TAP], dtype=np.float64)
    return jnp.asarray(np.outer(v, v), dtype=jnp.float32)


def _make_stencil_kernel(H: int, W: int, r: float):
    """Pallas kernel over (Bt, H*W) tiles: one flattened image per sublane row."""
    HW = H * W

    def gaussian_stencil_kernel(x_ref, o_ref):
        x = x_ref[...]                                          # (Bt, H*W) f32
        lane = jax.lax.broadcasted_iota(jnp.int32, x.shape, 1)  # flattened idx
        col = lane % W                                          # in-image column

        # Horizontal 3-tap pass: +-1 lane shifts (positive rotation amounts).
        # Wrapped lanes land only where the padding masks select 0.
        left = jnp.where(col == 0, 0.0, pltpu.roll(x, shift=1, axis=1))
        right = jnp.where(col == W - 1, 0.0, pltpu.roll(x, shift=HW - 1, axis=1))
        h = x + r * (left + right)

        # Vertical 3-tap pass: row +-1 == +-W lane shifts on the flat image.
        up = jnp.where(lane < W, 0.0, pltpu.roll(h, shift=W, axis=1))
        down = jnp.where(lane >= (H - 1) * W, 0.0,
                         pltpu.roll(h, shift=HW - W, axis=1))
        o_ref[...] = (h + r * (up + down)).astype(o_ref.dtype)

    return gaussian_stencil_kernel


def _choose_batch_tile(n: int, hw: int, elem_bytes: int = 4,
                       target_block_bytes: int = 2 << 20) -> int:
    """Images per grid step: ~2 MiB blocks, multiple of 8, >=2 steps for big N."""
    bt = target_block_bytes // max(hw * elem_bytes, 1)
    if bt < 8:
        return n  # TODO(synk): huge images -> H-tiled variant with row halo.
    if bt >= n:
        if n >= 16:  # split one big block so both v7x TensorCores get work
            return min(n, max(8, (((n + 1) // 2 + 7) // 8) * 8))
        return n
    return (bt // 8) * 8


def gaussian_layer_forward(x_nchw: jax.Array) -> jax.Array:
    """GaussianLayer.forward: conv2d(x, k, stride=1, padding=1, bias=None).

    x_nchw: (N, 1, H, W).  Returns (N, 1, H, W) float32.
    """
    N, C, H, W = x_nchw.shape
    if C != 1:
        raise ValueError("GaussianLayer is a single-channel (1 -> 1) conv.")
    if x_nchw.dtype != jnp.float32:
        x_nchw = x_nchw.astype(jnp.float32)

    HW = H * W
    x2d = x_nchw.reshape(N, HW)          # contiguous reshape: no extra HBM pass
    bt = _choose_batch_tile(N, HW)

    out = pl.pallas_call(
        _make_stencil_kernel(H, W, _EDGE_TAP),
        out_shape=jax.ShapeDtypeStruct((N, HW), jnp.float32),
        grid=(pl.cdiv(N, bt),),
        in_specs=[pl.BlockSpec((bt, HW), lambda i: (i, 0))],
        out_specs=pl.BlockSpec((bt, HW), lambda i: (i, 0)),
        compiler_params=pltpu.CompilerParams(
            dimension_semantics=("parallel",)),
    )(x2d)
    return out.reshape(N, 1, H, W)


def _reference(x_nchw: jax.Array) -> jax.Array:
    k = gaussian3x3_kernel()
    return jax.lax.conv_general_dilated(
        x_nchw.astype(jnp.float32), k[None, None, :, :],
        window_strides=(1, 1), padding=((1, 1), (1, 1)),
        dimension_numbers=("NCHW", "OIHW", "NCHW"),
        precision=jax.lax.Precision.HIGHEST)


if __name__ == "__main__":
    key = jax.random.PRNGKey(0)
    fwd = jax.jit(gaussian_layer_forward)

    # Primary shape consistent with the module: (N=2, C=1, H=16, W=16).
    x = jax.random.normal(key, (2, 1, 16, 16), jnp.float32)
    y = jax.block_until_ready(fwd(x))
    assert y.shape == (2, 1, 16, 16), y.shape
    assert bool(jnp.all(jnp.isfinite(y)))
    assert float(jnp.max(jnp.abs(y - _reference(x)))) < 1e-5

    # Second case through the same kernel: odd batch, non-square image.
    x2 = jax.random.normal(jax.random.PRNGKey(1), (3, 1, 8, 16), jnp.float32)
    y2 = jax.block_until_ready(fwd(x2))
    assert y2.shape == (3, 1, 8, 16), y2.shape
    assert float(jnp.max(jnp.abs(y2 - _reference(x2)))) < 1e-5

    print("KERNEL_OK")
</pallas_src>

<mosaic_0001>
module attributes {stable_mosaic.version = 11 : i64} {
  func.func @gaussian_stencil_kernel(%arg0: i32, %arg1: memref<2x256xf32, #tpu.memory_space<vmem>>, %arg2: memref<2x256xf32, #tpu.memory_space<vmem>>) attributes {dimension_semantics = [#tpu.dimension_semantics<parallel>], iteration_bounds = array<i64: 1>, scalar_prefetch = 0 : i64, scratch_operands = 0 : i64, tpu.core_type = #tpu.core_type<tc>, window_params = [{transform_indices = @transform_0, window_bounds = array<i64: 2, 256>}, {transform_indices = @transform_1, window_bounds = array<i64: 2, 256>}]} {
    %c0 = arith.constant 0 : index
    %c0_0 = arith.constant 0 : index
    %0 = vector.load %arg1[%c0, %c0_0] : memref<2x256xf32, #tpu.memory_space<vmem>>, vector<2x256xf32>
    %1 = tpu.iota {dimensions = array<i32: 1>} : vector<2x256xi32>
    %c16_i32 = arith.constant 16 : i32
    %c0_i32 = arith.constant 0 : i32
    %2 = arith.cmpi eq, %c16_i32, %c0_i32 : i32
    %c1_i32 = arith.constant 1 : i32
    %3 = arith.select %2, %c1_i32, %c16_i32 : i32
    %4 = vector.broadcast %3 : i32 to vector<2x256xi32>
    %5 = arith.remsi %1, %4 : vector<2x256xi32>
    %c0_i32_1 = arith.constant 0 : i32
    %6 = vector.broadcast %c0_i32_1 : i32 to vector<2x256xi32>
    %7 = arith.cmpi ne, %5, %6 : vector<2x256xi32>
    %c0_i32_2 = arith.constant 0 : i32
    %8 = vector.broadcast %c0_i32_2 : i32 to vector<2x256xi32>
    %9 = arith.cmpi slt, %5, %8 : vector<2x256xi32>
    %c0_i32_3 = arith.constant 0 : i32
    %10 = arith.cmpi slt, %3, %c0_i32_3 : i32
    %11 = vector.broadcast %10 : i1 to vector<2x256xi1>
    %12 = vector.broadcast %11 : vector<2x256xi1> to vector<2x256xi1>
    %13 = arith.xori %9, %12 : vector<2x256xi1>
    %14 = arith.andi %13, %7 : vector<2x256xi1>
    %15 = vector.broadcast %3 : i32 to vector<2x256xi32>
    %16 = arith.addi %5, %15 : vector<2x256xi32>
    %17 = arith.select %14, %16, %5 : vector<2x256xi1>, vector<2x256xi32>
    %c0_i32_4 = arith.constant 0 : i32
    %18 = vector.broadcast %c0_i32_4 : i32 to vector<2x256xi32>
    %19 = arith.cmpi eq, %17, %18 : vector<2x256xi32>
    %c1_i32_5 = arith.constant 1 : i32
    %20 = tpu.dynamic_rotate %0 by %c1_i32_5 dim 1 : vector<2x256xf32>, i32 -> vector<2x256xf32>
    %cst = arith.constant 0.000000e+00 : f32
    %21 = vector.broadcast %cst : f32 to vector<2x256xf32>
    %22 = arith.select %19, %21, %20 : vector<2x256xi1>, vector<2x256xf32>
    %c15_i32 = arith.constant 15 : i32
    %23 = vector.broadcast %c15_i32 : i32 to vector<2x256xi32>
    %24 = arith.cmpi eq, %17, %23 : vector<2x256xi32>
    %c255_i32 = arith.constant 255 : i32
    %25 = tpu.dynamic_rotate %0 by %c255_i32 dim 1 : vector<2x256xf32>, i32 -> vector<2x256xf32>
    %cst_6 = arith.constant 0.000000e+00 : f32
    %26 = vector.broadcast %cst_6 : f32 to vector<2x256xf32>
    %27 = arith.select %24, %26, %25 : vector<2x256xi1>, vector<2x256xf32>
    %28 = arith.addf %22, %27 : vector<2x256xf32>
    %cst_7 = arith.constant 0.135670751 : f32
    %29 = vector.broadcast %cst_7 : f32 to vector<2x256xf32>
    %30 = arith.mulf %29, %28 : vector<2x256xf32>
    %31 = arith.addf %0, %30 : vector<2x256xf32>
    %c16_i32_8 = arith.constant 16 : i32
    %32 = vector.broadcast %c16_i32_8 : i32 to vector<2x256xi32>
    %33 = arith.cmpi slt, %1, %32 : vector<2x256xi32>
    %c16_i32_9 = arith.constant 16 : i32
    %34 = tpu.dynamic_rotate %31 by %c16_i32_9 dim 1 : vector<2x256xf32>, i32 -> vector<2x256xf32>
    %cst_10 = arith.constant 0.000000e+00 : f32
    %35 = vector.broadcast %cst_10 : f32 to vector<2x256xf32>
    %36 = arith.select %33, %35, %34 : vector<2x256xi1>, vector<2x256xf32>
    %c240_i32 = arith.constant 240 : i32
    %37 = vector.broadcast %c240_i32 : i32 to vector<2x256xi32>
    %38 = arith.cmpi sge, %1, %37 : vector<2x256xi32>
    %c240_i32_11 = arith.constant 240 : i32
    %39 = tpu.dynamic_rotate %31 by %c240_i32_11 dim 1 : vector<2x256xf32>, i32 -> vector<2x256xf32>
    %cst_12 = arith.constant 0.000000e+00 : f32
    %40 = vector.broadcast %cst_12 : f32 to vector<2x256xf32>
    %41 = arith.select %38, %40, %39 : vector<2x256xi1>, vector<2x256xf32>
    %42 = arith.addf %36, %41 : vector<2x256xf32>
    %cst_13 = arith.constant 0.135670751 : f32
    %43 = vector.broadcast %cst_13 : f32 to vector<2x256xf32>
    %44 = arith.mulf %43, %42 : vector<2x256xf32>
    %45 = arith.addf %31, %44 : vector<2x256xf32>
    %c0_14 = arith.constant 0 : index
    %c0_15 = arith.constant 0 : index
    %46 = vector.load %arg2[%c0_14, %c0_15] : memref<2x256xf32, #tpu.memory_space<vmem>>, vector<2x256xf32>
    tpu.vector_store %arg2[%c0_14, %c0_15], %45 {strides = array<i32>} : memref<2x256xf32, #tpu.memory_space<vmem>>, vector<2x256xf32>,
    return
  }
  func.func @transform_0(%arg0: i32) -> (i32, i32) {
    %c0_i32 = arith.constant 0 : i32
    %c0_i32_0 = arith.constant 0 : i32
    return %arg0, %c0_i32 : i32, i32
  }
  func.func @transform_1(%arg0: i32) -> (i32, i32) {
    %c0_i32 = arith.constant 0 : i32
    %c0_i32_0 = arith.constant 0 : i32
    return %arg0, %c0_i32 : i32, i32
  }
}

</mosaic_0001>

<llo_original>
// kernel: gaussian_layer_forward.1
$region0: #{gaussian_layer_forward.1}
  #allocation0 [shape = 'u32[]', space=smem, size = 0x4, offset = 0x4, fixed_abs, tag = 'smem constant byte address 0x4 - core index']
  #allocation1 [shape = 'u32[144,128]{1,0:T(1,128)}', space=vmem, size = 0x12000, scoped, tag = 'internal scratch']
  %s0 = inlined_call_operand.vmem [shape: f32[2,256], index: 0, kind: input, shape index: {}]
  %s1 = inlined_call_operand.vmem [shape: f32[2,256], index: 1, kind: output, shape index: {}]
  %s2 = sld [smem:[#allocation0]]
  $region14: #{gaussian_layer_forward.1} parent=0
    _
  %s4 = ssub.s32 1, %s2
  %s5 = scalar_select 0, %s4, %s2
  // Predicated region
  $region2: #{gaussian_layer_forward.1} parent=0 // pred_check
    _
  $region3: #{gaussian_layer_forward.1} parent=0 // pred_check_branch
    %7 = sbr.rel (0) target = $region5
  $region4: #{gaussian_layer_forward.1} parent=0 // pred_region
    _
  $region5: #{gaussian_layer_forward.1} parent=0 // pred_fallthru
    _
  %v8 = vld [vmem:[%s0] sm:$0xf]
  %v9 = vlaneseq
  %v10 = vand.u32 %v9, 127
  %v11 = vadd.s32 %v10, 128
  %vm12 = vcmp.lt.s32.totalorder %v10, 0
  %v13 = vsub.s32 0, %v10
  %v14 = vsel %vm12, %v13, %v10
  %v15 = vshrl.u32 %v14, 4
  %v16 = vand.u32 %v14, 15
  %v17 = vsub.s32 0, %v16
  %v18 = vsel %vm12, %v17, %v16
  %vm19 = vcmp.lt.s32.totalorder %v11, 0
  %v20 = vsub.s32 0, %v11
  %v21 = vsel %vm19, %v20, %v11
  %v22 = vshrl.u32 %v21, 4
  %v23 = vand.u32 %v21, 15
  %v24 = vsub.s32 0, %v23
  %v25 = vsel %vm19, %v24, %v23
  %vm26 = vcmp.ne.s32.totalorder %v18, 0
  %vm27 = vcmp.ne.s32.totalorder %v25, 0
  %vm28 = vcmp.lt.s32.totalorder %v18, 0
  %vm29 = vcmp.lt.s32.totalorder %v25, 0
  %vm30 = vmand %vm28, %vm26
  %vm31 = vmand %vm29, %vm27
  %v32 = vadd.s32 %v18, 16
  %v33 = vadd.s32 %v25, 16
  %v34 = vsel %vm30, %v32, %v18
  %v35 = vsel %vm31, %v33, %v25
  %vm36 = vcmp.eq.s32.totalorder %v34, 0
  %vm37 = vcmp.eq.s32.totalorder %v35, 0
  %v40 = vunpack.c.l.s4 1983009808
  %v41 = vunpack.c.0.s8 %v40
  %v42 = vlaneseq
  %v43 = vshrl.u32 %v42, 7
  %v44 = vsub.s32 %v41, %v43
  %v45 = vrot.slane %v8, %v44
  %v46 = vcombine.high %v45, %v45
  %49 = vrot.lane.b32.xlu0 %v45, 1
  %v50 = vpop.permute.xlu0 %49
  %51 = vrot.lane.b32.xlu0 %v46, 1
  %v52 = vpop.permute.xlu0 %51
  %vm53 = vcmp.lt.s32.totalorder %v10, 1
  %v54 = vsel %vm53, %v50, %v52
  %v55 = vsel %vm53, %v52, %v50
  %v56 = vsel %vm36, 0.0, %v55
  %v57 = vsel %vm37, 0.0, %v54
  %vm58 = vcmp.eq.s32.totalorder %v34, 15
  %vm59 = vcmp.eq.s32.totalorder %v35, 15
  %60 = vrot.lane.b32.xlu0 %v45, 127
  %v61 = vpop.permute.xlu0 %60
  %62 = vrot.lane.b32.xlu0 %v46, 127
  %v63 = vpop.permute.xlu0 %62
  %vm64 = vcmp.lt.s32.totalorder %v10, 127
  %v65 = vsel %vm64, %v61, %v63
  %v66 = vsel %vm64, %v63, %v61
  %v67 = vsel %vm58, 0.0, %v65
  %v68 = vsel %vm59, 0.0, %v66
  %v69 = vadd.f32 %v56, %v67
  %v70 = vadd.f32 %v57, %v68
  %v71 = vmul.f32 %v69, 0.13567075
  %v72 = vmul.f32 %v70, 0.13567075
  %v75 = vcombine.low %v71, %v72
  %v77 = vunpack.c.l.s4 1983009808
  %v78 = vunpack.c.0.s8 %v77
  %v79 = vlaneseq
  %v80 = vshrl.u32 %v79, 7
  %v81 = vsub.s32 %v78, %v80
  %v82 = vrot.slane %v75, %v81
  %v84 = vadd.f32 %v8, %v82
  %vm85 = vcmp.lt.s32.totalorder %v10, 16
  %vm86 = vcmp.lt.s32.totalorder %v11, 16
  %v89 = vunpack.c.l.s4 1983009808
  %v90 = vunpack.c.0.s8 %v89
  %v91 = vlaneseq
  %v92 = vshrl.u32 %v91, 7
  %v93 = vsub.s32 %v90, %v92
  %v94 = vrot.slane %v84, %v93
  %v95 = vcombine.high %v94, %v94
  %98 = vrot.lane.b32.xlu0 %v94, 16
  %v99 = vpop.permute.xlu0 %98
  %100 = vrot.lane.b32.xlu0 %v95, 16
  %v101 = vpop.permute.xlu0 %100
  %v102 = vsel %vm85, %v99, %v101
  %v103 = vsel %vm85, %v101, %v99
  %v104 = vsel %vm85, 0.0, %v103
  %v105 = vsel %vm86, 0.0, %v102
  %vm106 = vcmp.ge.s32.totalorder %v10, 240
  %vm107 = vcmp.ge.s32.totalorder %v11, 240
  %108 = vrot.lane.b32.xlu0 %v94, 112
  %v109 = vpop.permute.xlu0 %108
  %110 = vrot.lane.b32.xlu0 %v95, 112
  %v111 = vpop.permute.xlu0 %110
  %vm112 = vcmp.lt.s32.totalorder %v10, 112
  %v113 = vsel %vm112, %v109, %v111
  %v114 = vsel %vm112, %v111, %v109
  %v115 = vsel %vm106, 0.0, %v113
  %v116 = vsel %vm107, 0.0, %v114
  %v117 = vadd.f32 %v104, %v115
  %v118 = vadd.f32 %v105, %v116
  %v119 = vmul.f32 %v117, 0.13567075
  %v120 = vmul.f32 %v118, 0.13567075
  %v123 = vcombine.low %v119, %v120
  %v125 = vunpack.c.l.s4 1983009808
  %v126 = vunpack.c.0.s8 %v125
  %v127 = vlaneseq
  %v128 = vshrl.u32 %v127, 7
  %v129 = vsub.s32 %v126, %v128
  %v130 = vrot.slane %v123, %v129
  %v132 = vadd.f32 %v84, %v130
  %133 = vst [vmem:[%s1] sm:$0xf] %v132
  // Predicated region
  $region6: #{gaussian_layer_forward.1} parent=0 // pred_check
    _
  $region7: #{gaussian_layer_forward.1} parent=0 // pred_check_branch
    %135 = sbr.rel (0) target = $region9
  $region8: #{gaussian_layer_forward.1} parent=0 // pred_region
    _
  $region9: #{gaussian_layer_forward.1} parent=0 // pred_fallthru
    _
  // Predicated region
  $region10: #{gaussian_layer_forward.1} parent=0 // pred_check
    _
  $region11: #{gaussian_layer_forward.1} parent=0 // pred_check_branch
    %137 = sbr.rel (0) target = $region13
  $region12: #{gaussian_layer_forward.1} parent=0 // pred_region
    _
  $region13: #{gaussian_layer_forward.1} parent=0 // pred_fallthru
    _

</llo_original>
